<compile_context>
chip_gen: v6e
topology: v6e:2x2x1
jax: 0.10.0
libtpu: 0.0.40
codegen_flags: <defaults>
</compile_context>

<pallas_src>
import functools

import jax
import jax.numpy as jnp
from jax.experimental import pallas as pl
from jax.experimental.pallas import tpu as pltpu

LANE = 128


# ------------------------------- helpers ----------------------------------- #
def _round_up(x, m):
    return ((x + m - 1) // m) * m


def _pad2d(x, rows, cols, dtype):
    x = x.astype(dtype)
    return jnp.pad(x, ((0, rows - x.shape[0]), (0, cols - x.shape[1])))


def _pick_tile(n128, max_tile, min_tiles):
    """Largest multiple-of-128 tile <= max_tile that exactly divides n128 and
    leaves at least `min_tiles` tiles; falls back to 128."""
    t = min(max_tile, n128)
    t -= t % LANE
    while t >= LANE:
        if n128 % t == 0 and n128 // t >= min_tiles:
            return t
        t -= LANE
    return LANE


def _vmem_capacity_bytes():
    try:
        return int(pltpu.get_tpu_info().vmem_capacity_bytes)
    except Exception:
        return 64 * 1024 * 1024  # conservative (v7x per-TC VMEM)


def _fused_vmem_bytes(n128, dims):
    """Rough VMEM estimate for the fully fused (A-resident) layer stack."""
    d_in0_p = _round_up(dims[0][0], LANE)
    total = n128 * n128 * 2 + n128 * d_in0_p * 2          # A (bf16) + X (bf16)
    for (di, do) in dims:
        dip, dop = _round_up(di, LANE), _round_up(do, LANE)
        total += dip * dop * 2 + dop * 4                   # W (bf16) + b (f32)
        total += n128 * dop * 4                            # Z output (f32)
        total += n128 * dop * 4                            # intermediates
    return total


def _fits_fused(n128, dims):
    return n128 <= 4096 and _fused_vmem_bytes(n128, dims) <= 0.4 * _vmem_capacity_bytes()


# ----------------------------- Pallas kernels ------------------------------ #
def agg_then_w_kernel(a_ref, x_ref, w_ref, b_ref, z_ref, h_ref, acc_ref):
    """acc += A_tile @ X_tile ; finalize: Z = (acc) @ W + b, H = relu(Z) bf16."""
    k = pl.program_id(1)

    @pl.when(k == 0)
    def _init():
        acc_ref[...] = jnp.zeros_like(acc_ref)

    acc_ref[...] += jnp.dot(a_ref[...], x_ref[...],
                            preferred_element_type=jnp.float32)

    @pl.when(k == pl.num_programs(1) - 1)
    def _finalize():
        z = jnp.dot(acc_ref[...].astype(jnp.bfloat16), w_ref[...],
                    preferred_element_type=jnp.float32) + b_ref[...]
        z_ref[...] = z
        h_ref[...] = jnp.maximum(z, 0.0).astype(jnp.bfloat16)


def agg_bias_kernel(a_ref, m_ref, b_ref, z_ref, h_ref, acc_ref):
    """acc += A_tile @ M_tile ; finalize: Z = acc + b, H = relu(Z) bf16."""
    k = pl.program_id(1)

    @pl.when(k == 0)
    def _init():
        acc_ref[...] = jnp.zeros_like(acc_ref)

    acc_ref[...] += jnp.dot(a_ref[...], m_ref[...],
                            preferred_element_type=jnp.float32)

    @pl.when(k == pl.num_programs(1) - 1)
    def _finalize():
        z = acc_ref[...] + b_ref[...]
        z_ref[...] = z
        h_ref[...] = jnp.maximum(z, 0.0).astype(jnp.bfloat16)


def xw_kernel(x_ref, w_ref, m_ref):
    """Small feature transform M = X @ W (computed once, not per A row tile)."""
    m_ref[...] = jnp.dot(x_ref[...], w_ref[...],
                         preferred_element_type=jnp.float32).astype(m_ref.dtype)


def _make_fused_kernel(dims):
    """Whole GCN stack in one kernel: A/W/b VMEM-resident, h stays on-chip."""
    n_layers = len(dims)

    def kernel(*refs):
        a_ref, x_ref = refs[0], refs[1]
        w_refs = refs[2:2 + 2 * n_layers:2]
        b_refs = refs[3:2 + 2 * n_layers:2]
        z_refs = refs[2 + 2 * n_layers:]

        a = a_ref[...]
        h = x_ref[...]
        for li, (d_in, d_out) in enumerate(dims):
            w = w_refs[li][...]
            b = b_refs[li][...]
            if d_in <= d_out:
                ax = jnp.dot(a, h, preferred_element_type=jnp.float32)
                z = jnp.dot(ax.astype(jnp.bfloat16), w,
                            preferred_element_type=jnp.float32) + b
            else:
                m = jnp.dot(h, w,
                            preferred_element_type=jnp.float32).astype(jnp.bfloat16)
                z = jnp.dot(a, m, preferred_element_type=jnp.float32) + b
            z_refs[li][...] = z
            h = jnp.maximum(z, 0.0).astype(jnp.bfloat16)

    return kernel


# ------------------------------ layer wrappers ------------------------------ #
def graph_conv_layer_tiled(a_p, h_p, w, b):
    """One tiled GraphConv layer.

    a_p: (n128, n128) bf16 padded normalized adjacency (shared across layers).
    h_p: (n128, d_in_p) bf16 padded activations.
    Returns (z_p f32 (n128, d_out_p), h_next_p bf16 (n128, d_out_p)).
    """
    n128 = a_p.shape[0]
    d_in, d_out = w.shape
    d_in_p = _round_up(d_in, LANE)
    d_out_p = _round_up(d_out, LANE)

    tm = _pick_tile(n128, 1024, 2)   # row tile (parallel; >=2 tiles when possible)
    tk = _pick_tile(n128, 512, 1)    # reduction tile (arbitrary)
    grid = (n128 // tm, n128 // tk)

    w_p = _pad2d(w, d_in_p, d_out_p, jnp.bfloat16)
    b_p = _pad2d(b.reshape(1, d_out), 1, d_out_p, jnp.float32)

    cparams = pltpu.CompilerParams(
        dimension_semantics=("parallel", "arbitrary"),
        vmem_limit_bytes=32 * 1024 * 1024,
    )
    out_shape = (jax.ShapeDtypeStruct((n128, d_out_p), jnp.float32),
                 jax.ShapeDtypeStruct((n128, d_out_p), jnp.bfloat16))
    out_specs = (pl.BlockSpec((tm, d_out_p), lambda i, k: (i, 0)),
                 pl.BlockSpec((tm, d_out_p), lambda i, k: (i, 0)))

    if d_in <= d_out:
        z_p, hn_p = pl.pallas_call(
            agg_then_w_kernel,
            out_shape=out_shape,
            grid_spec=pltpu.PrefetchScalarGridSpec(
                num_scalar_prefetch=0,
                grid=grid,
                in_specs=[
                    pl.BlockSpec((tm, tk), lambda i, k: (i, k)),           # A tile
                    pl.BlockSpec((tk, d_in_p), lambda i, k: (k, 0)),       # H tile
                    pl.BlockSpec((d_in_p, d_out_p), lambda i, k: (0, 0)),  # W
                    pl.BlockSpec((1, d_out_p), lambda i, k: (0, 0)),       # bias
                ],
                out_specs=out_specs,
                scratch_shapes=[pltpu.VMEM((tm, d_in_p), jnp.float32)],
            ),
            compiler_params=cparams,
        )(a_p, h_p, w_p, b_p)
    else:
        m_p = pl.pallas_call(
            xw_kernel,
            out_shape=jax.ShapeDtypeStruct((n128, d_out_p), jnp.bfloat16),
            grid_spec=pltpu.PrefetchScalarGridSpec(
                num_scalar_prefetch=0,
                grid=(n128 // tm,),
                in_specs=[
                    pl.BlockSpec((tm, d_in_p), lambda i: (i, 0)),
                    pl.BlockSpec((d_in_p, d_out_p), lambda i: (0, 0)),
                ],
                out_specs=pl.BlockSpec((tm, d_out_p), lambda i: (i, 0)),
            ),
            compiler_params=pltpu.CompilerParams(
                dimension_semantics=("parallel",),
                vmem_limit_bytes=32 * 1024 * 1024,
            ),
        )(h_p, w_p)
        z_p, hn_p = pl.pallas_call(
            agg_bias_kernel,
            out_shape=out_shape,
            grid_spec=pltpu.PrefetchScalarGridSpec(
                num_scalar_prefetch=0,
                grid=grid,
                in_specs=[
                    pl.BlockSpec((tm, tk), lambda i, k: (i, k)),         # A tile
                    pl.BlockSpec((tk, d_out_p), lambda i, k: (k, 0)),    # M tile
                    pl.BlockSpec((1, d_out_p), lambda i, k: (0, 0)),     # bias
                ],
                out_specs=out_specs,
                scratch_shapes=[pltpu.VMEM((tm, d_out_p), jnp.float32)],
            ),
            compiler_params=cparams,
        )(a_p, m_p, b_p)

    return z_p, hn_p


def gcn_fused(a_p, x_p, params, dims, n128):
    """All layers in one pallas_call (small/medium graphs)."""
    kernel = _make_fused_kernel(dims)
    inputs = [a_p, x_p]
    for (w, b), (d_in, d_out) in zip(params, dims):
        d_in_p, d_out_p = _round_up(d_in, LANE), _round_up(d_out, LANE)
        inputs.append(_pad2d(w, d_in_p, d_out_p, jnp.bfloat16))
        inputs.append(_pad2d(b.reshape(1, d_out), 1, d_out_p, jnp.float32))
    out_shape = tuple(
        jax.ShapeDtypeStruct((n128, _round_up(do, LANE)), jnp.float32)
        for (_, do) in dims)
    cap = _vmem_capacity_bytes()
    return pl.pallas_call(
        kernel,
        out_shape=out_shape,
        compiler_params=pltpu.CompilerParams(
            vmem_limit_bytes=int(min(0.7 * cap, 96 * 2 ** 20))),
    )(*inputs)


# ------------------------------- GCN module -------------------------------- #
def init_gcn_params(key, n_layers, in_dim, hid_dim, out_dim):
    assert n_layers >= 2
    dims = [(in_dim, hid_dim)] + [(hid_dim, hid_dim)] * (n_layers - 2) + \
           [(hid_dim, out_dim)]
    params = []
    for (di, do) in dims:
        key, kw, kb = jax.random.split(key, 3)
        limit = (6.0 / (di + do)) ** 0.5                     # Glorot-uniform W
        w = jax.random.uniform(kw, (di, do), jnp.float32, -limit, limit)
        # DGL default bias is zeros; use a small random bias here so the bias
        # path is genuinely exercised (forward semantics unchanged).
        b = 0.01 * jax.random.normal(kb, (do,), jnp.float32)
        params.append((w, b))
    return params


@functools.partial(jax.jit, static_argnames=("force_tiled",))
def gcn_forward(a_norm, feat, params, force_tiled=False):
    """Reproduces GCN.forward: returns (h, h_list, h_act_list)."""
    n = feat.shape[0]
    n128 = _round_up(n, LANE)
    dims = tuple((int(w.shape[0]), int(w.shape[1])) for (w, _) in params)

    # Pad + bf16-cast A ONCE for the whole layer stack (dominant N^2 stream).
    a_p = _pad2d(a_norm, n128, n128, jnp.bfloat16)
    x_p = _pad2d(feat, n128, _round_up(dims[0][0], LANE), jnp.bfloat16)

    h_list = [feat]
    h_act_list = [feat]

    if (not force_tiled) and _fits_fused(n128, dims):
        z_list_p = gcn_fused(a_p, x_p, params, dims, n128)
        h = feat
        for z_p, (d_in, d_out) in zip(z_list_p, dims):
            z = z_p[:n, :d_out]
            h = jnp.maximum(z, 0.0)
            h_list.append(z)
            h_act_list.append(h)
        return h, h_list, h_act_list

    # Tiled streaming path: activations stay padded bf16 between layers.
    h_p = x_p
    for (w, b), (d_in, d_out) in zip(params, dims):
        z_p, h_p = graph_conv_layer_tiled(a_p, h_p, w, b)
        z = z_p[:n, :d_out]
        h_list.append(z)
        h_act_list.append(jnp.maximum(z, 0.0))
    return h_act_list[-1], h_list, h_act_list


def build_normalized_adjacency(key, n_nodes, p_edge=0.1):
    a = (jax.random.uniform(key, (n_nodes, n_nodes)) < p_edge).astype(jnp.float32)
    a = jnp.maximum(a, a.T)
    a = a + jnp.eye(n_nodes, dtype=jnp.float32)     # self-loops avoid 0-degree
    deg = jnp.sum(a, axis=1)
    d_inv_sqrt = 1.0 / jnp.sqrt(deg)
    return a * d_inv_sqrt[:, None] * d_inv_sqrt[None, :]


# ------------------------------- references -------------------------------- #
def gcn_reference(a_norm, feat, params, quantized):
    """Pure-JAX reference; quantized=True mirrors the kernels' bf16/f32 recipe."""
    h = feat
    for (w, b) in params:
        d_in, d_out = w.shape
        if quantized:
            a_m = a_norm.astype(jnp.bfloat16)
            h_m = h.astype(jnp.bfloat16)
            w_m = w.astype(jnp.bfloat16)
            if d_in <= d_out:
                ax = jnp.dot(a_m, h_m, preferred_element_type=jnp.float32)
                z = jnp.dot(ax.astype(jnp.bfloat16), w_m,
                            preferred_element_type=jnp.float32) + b[None, :]
            else:
                m = jnp.dot(h_m, w_m,
                            preferred_element_type=jnp.float32).astype(jnp.bfloat16)
                z = jnp.dot(a_m, m, preferred_element_type=jnp.float32) + b[None, :]
        else:
            z = a_norm @ (h @ w) + b[None, :]
        h = jnp.maximum(z, 0.0)
    return h


def _check(h, h_list, h_act_list, ref_q, ref_f32, n_nodes, out_dim, n_layers, tag):
    assert h.shape == (n_nodes, out_dim), f"[{tag}] bad shape {h.shape}"
    assert len(h_list) == n_layers + 1 and len(h_act_list) == n_layers + 1
    assert jnp.allclose(h, ref_q, atol=1e-2, rtol=1e-2), \
        f"[{tag}] mismatch vs quantized ref: {jnp.max(jnp.abs(h - ref_q))}"
    assert jnp.allclose(h, ref_f32, atol=2e-1, rtol=2e-1), \
        f"[{tag}] mismatch vs f32 ref: {jnp.max(jnp.abs(h - ref_f32))}"
    assert jnp.allclose(jnp.maximum(h_list[1], 0.0), h_act_list[1], atol=1e-6), \
        f"[{tag}] relu(h_list[1]) != h_act_list[1]"


# --------------------------------- main ------------------------------------ #
if __name__ == "__main__":
    key = jax.random.PRNGKey(0)
    k_graph, k_feat, k_param, k_graph2, k_feat2 = jax.random.split(key, 5)

    in_dim, hid_dim, out_dim, n_layers = 16, 32, 8, 3

    # --- small demo graph (fused single-kernel path + forced tiled path) ---
    n_nodes = 64
    a_norm = build_normalized_adjacency(k_graph, n_nodes)
    feat = jax.random.normal(k_feat, (n_nodes, in_dim), jnp.float32)
    params = init_gcn_params(k_param, n_layers, in_dim, hid_dim, out_dim)

    ref_q = gcn_reference(a_norm, feat, params, quantized=True)
    ref_f32 = gcn_reference(a_norm, feat, params, quantized=False)

    for force_tiled in (False, True):
        h, h_list, h_act_list = gcn_forward(a_norm, feat, params,
                                            force_tiled=force_tiled)
        jax.block_until_ready((h, h_list, h_act_list))
        _check(h, h_list, h_act_list, ref_q, ref_f32, n_nodes, out_dim, n_layers,
               "tiled" if force_tiled else "fused")

    # --- non-128-multiple graph: exercises padding/grid fix on the tiled path ---
    n_nodes2 = 300
    a_norm2 = build_normalized_adjacency(k_graph2, n_nodes2)
    feat2 = jax.random.normal(k_feat2, (n_nodes2, in_dim), jnp.float32)
    ref_q2 = gcn_reference(a_norm2, feat2, params, quantized=True)
    ref_f322 = gcn_reference(a_norm2, feat2, params, quantized=False)
    h2, h_list2, h_act_list2 = gcn_forward(a_norm2, feat2, params,
                                           force_tiled=True)
    jax.block_until_ready((h2, h_list2, h_act_list2))
    _check(h2, h_list2, h_act_list2, ref_q2, ref_f322, n_nodes2, out_dim,
           n_layers, "tiled_n300")

    print("KERNEL_OK")
</pallas_src>

<mosaic_0001>
module attributes {stable_mosaic.version = 11 : i64} {
  func.func @kernel(%arg0: memref<128x128xbf16, #tpu.memory_space<vmem>>, %arg1: memref<128x128xbf16, #tpu.memory_space<vmem>>, %arg2: memref<128x128xbf16, #tpu.memory_space<vmem>>, %arg3: memref<1x128xf32, #tpu.memory_space<vmem>>, %arg4: memref<128x128xbf16, #tpu.memory_space<vmem>>, %arg5: memref<1x128xf32, #tpu.memory_space<vmem>>, %arg6: memref<128x128xbf16, #tpu.memory_space<vmem>>, %arg7: memref<1x128xf32, #tpu.memory_space<vmem>>, %arg8: memref<128x128xf32, #tpu.memory_space<vmem>>, %arg9: memref<128x128xf32, #tpu.memory_space<vmem>>, %arg10: memref<128x128xf32, #tpu.memory_space<vmem>>) attributes {dimension_semantics = [], scalar_prefetch = 0 : i64, scratch_operands = 0 : i64, tpu.core_type = #tpu.core_type<tc>} {
    %c0 = arith.constant 0 : index
    %c0_0 = arith.constant 0 : index
    %0 = vector.load %arg0[%c0, %c0_0] : memref<128x128xbf16, #tpu.memory_space<vmem>>, vector<128x128xbf16>
    %c0_1 = arith.constant 0 : index
    %c0_2 = arith.constant 0 : index
    %1 = vector.load %arg1[%c0_1, %c0_2] : memref<128x128xbf16, #tpu.memory_space<vmem>>, vector<128x128xbf16>
    %c0_3 = arith.constant 0 : index
    %c0_4 = arith.constant 0 : index
    %2 = vector.load %arg2[%c0_3, %c0_4] : memref<128x128xbf16, #tpu.memory_space<vmem>>, vector<128x128xbf16>
    %c0_5 = arith.constant 0 : index
    %c0_6 = arith.constant 0 : index
    %3 = vector.load %arg3[%c0_5, %c0_6] : memref<1x128xf32, #tpu.memory_space<vmem>>, vector<1x128xf32>
    %cst = arith.constant dense<0.000000e+00> : vector<128x128xf32>
    %4 = tpu.matmul %0, %1, %cst {dimension_numbers = #tpu.dot_dimension_numbers<[1], [0], [0], [1], [0, 0, 1, 1], [], []>} : vector<128x128xbf16>, vector<128x128xbf16>, vector<128x128xf32> -> vector<128x128xf32>
    %5 = arith.truncf %4 : vector<128x128xf32> to vector<128x128xbf16>
    %cst_7 = arith.constant dense<0.000000e+00> : vector<128x128xf32>
    %6 = tpu.matmul %5, %2, %cst_7 {dimension_numbers = #tpu.dot_dimension_numbers<[1], [0], [0], [1], [0, 0, 1, 1], [], []>} : vector<128x128xbf16>, vector<128x128xbf16>, vector<128x128xf32> -> vector<128x128xf32>
    %7 = vector.broadcast %3 : vector<1x128xf32> to vector<128x128xf32>
    %8 = arith.addf %6, %7 : vector<128x128xf32>
    %c0_8 = arith.constant 0 : index
    %c0_9 = arith.constant 0 : index
    %9 = vector.load %arg8[%c0_8, %c0_9] : memref<128x128xf32, #tpu.memory_space<vmem>>, vector<128x128xf32>
    tpu.vector_store %arg8[%c0_8, %c0_9], %8 {strides = array<i32>} : memref<128x128xf32, #tpu.memory_space<vmem>>, vector<128x128xf32>,
    %cst_10 = arith.constant 0.000000e+00 : f32
    %10 = vector.broadcast %cst_10 : f32 to vector<128x128xf32>
    %11 = arith.maximumf %8, %10 : vector<128x128xf32>
    %12 = arith.truncf %11 : vector<128x128xf32> to vector<128x128xbf16>
    %c0_11 = arith.constant 0 : index
    %c0_12 = arith.constant 0 : index
    %13 = vector.load %arg4[%c0_11, %c0_12] : memref<128x128xbf16, #tpu.memory_space<vmem>>, vector<128x128xbf16>
    %c0_13 = arith.constant 0 : index
    %c0_14 = arith.constant 0 : index
    %14 = vector.load %arg5[%c0_13, %c0_14] : memref<1x128xf32, #tpu.memory_space<vmem>>, vector<1x128xf32>
    %cst_15 = arith.constant dense<0.000000e+00> : vector<128x128xf32>
    %15 = tpu.matmul %0, %12, %cst_15 {dimension_numbers = #tpu.dot_dimension_numbers<[1], [0], [0], [1], [0, 0, 1, 1], [], []>} : vector<128x128xbf16>, vector<128x128xbf16>, vector<128x128xf32> -> vector<128x128xf32>
    %16 = arith.truncf %15 : vector<128x128xf32> to vector<128x128xbf16>
    %cst_16 = arith.constant dense<0.000000e+00> : vector<128x128xf32>
    %17 = tpu.matmul %16, %13, %cst_16 {dimension_numbers = #tpu.dot_dimension_numbers<[1], [0], [0], [1], [0, 0, 1, 1], [], []>} : vector<128x128xbf16>, vector<128x128xbf16>, vector<128x128xf32> -> vector<128x128xf32>
    %18 = vector.broadcast %14 : vector<1x128xf32> to vector<128x128xf32>
    %19 = arith.addf %17, %18 : vector<128x128xf32>
    %c0_17 = arith.constant 0 : index
    %c0_18 = arith.constant 0 : index
    %20 = vector.load %arg9[%c0_17, %c0_18] : memref<128x128xf32, #tpu.memory_space<vmem>>, vector<128x128xf32>
    tpu.vector_store %arg9[%c0_17, %c0_18], %19 {strides = array<i32>} : memref<128x128xf32, #tpu.memory_space<vmem>>, vector<128x128xf32>,
    %cst_19 = arith.constant 0.000000e+00 : f32
    %21 = vector.broadcast %cst_19 : f32 to vector<128x128xf32>
    %22 = arith.maximumf %19, %21 : vector<128x128xf32>
    %23 = arith.truncf %22 : vector<128x128xf32> to vector<128x128xbf16>
    %c0_20 = arith.constant 0 : index
    %c0_21 = arith.constant 0 : index
    %24 = vector.load %arg6[%c0_20, %c0_21] : memref<128x128xbf16, #tpu.memory_space<vmem>>, vector<128x128xbf16>
    %c0_22 = arith.constant 0 : index
    %c0_23 = arith.constant 0 : index
    %25 = vector.load %arg7[%c0_22, %c0_23] : memref<1x128xf32, #tpu.memory_space<vmem>>, vector<1x128xf32>
    %cst_24 = arith.constant dense<0.000000e+00> : vector<128x128xf32>
    %26 = tpu.matmul %23, %24, %cst_24 {dimension_numbers = #tpu.dot_dimension_numbers<[1], [0], [0], [1], [0, 0, 1, 1], [], []>} : vector<128x128xbf16>, vector<128x128xbf16>, vector<128x128xf32> -> vector<128x128xf32>
    %27 = arith.truncf %26 : vector<128x128xf32> to vector<128x128xbf16>
    %cst_25 = arith.constant dense<0.000000e+00> : vector<128x128xf32>
    %28 = tpu.matmul %0, %27, %cst_25 {dimension_numbers = #tpu.dot_dimension_numbers<[1], [0], [0], [1], [0, 0, 1, 1], [], []>} : vector<128x128xbf16>, vector<128x128xbf16>, vector<128x128xf32> -> vector<128x128xf32>
    %29 = vector.broadcast %25 : vector<1x128xf32> to vector<128x128xf32>
    %30 = arith.addf %28, %29 : vector<128x128xf32>
    %c0_26 = arith.constant 0 : index
    %c0_27 = arith.constant 0 : index
    %31 = vector.load %arg10[%c0_26, %c0_27] : memref<128x128xf32, #tpu.memory_space<vmem>>, vector<128x128xf32>
    tpu.vector_store %arg10[%c0_26, %c0_27], %30 {strides = array<i32>} : memref<128x128xf32, #tpu.memory_space<vmem>>, vector<128x128xf32>,
    return
  }
}

</mosaic_0001>

<llo_original>
// kernel: gcn_forward.1
$region0: #{gcn_forward.1}
  #allocation0 [shape = 'u32[]', space=smem, size = 0x4, offset = 0x4, fixed_abs, tag = 'smem constant byte address 0x4 - core index']
  #allocation1 [shape = 'u32[144,128]{1,0:T(1,128)}', space=vmem, size = 0x12000, scoped, tag = 'internal scratch']
  %s0 = inlined_call_operand.vmem [shape: bf16[128,128], index: 0, kind: input, shape index: {}]
  %s1 = inlined_call_operand.vmem [shape: bf16[128,128], index: 1, kind: input, shape index: {}]
  %s2 = inlined_call_operand.vmem [shape: bf16[128,128], index: 2, kind: input, shape index: {}]
  %s3 = inlined_call_operand.vmem [shape: f32[1,128], index: 3, kind: input, shape index: {}]
  %s4 = inlined_call_operand.vmem [shape: bf16[128,128], index: 4, kind: input, shape index: {}]
  %s5 = inlined_call_operand.vmem [shape: f32[1,128], index: 5, kind: input, shape index: {}]
  %s6 = inlined_call_operand.vmem [shape: bf16[128,128], index: 6, kind: input, shape index: {}]
  %s7 = inlined_call_operand.vmem [shape: f32[1,128], index: 7, kind: input, shape index: {}]
  %s8 = inlined_call_operand.vmem [shape: f32[128,128], index: 8, kind: output, shape index: {0}]
  %s9 = inlined_call_operand.vmem [shape: f32[128,128], index: 9, kind: output, shape index: {1}]
  %s10 = inlined_call_operand.vmem [shape: f32[128,128], index: 10, kind: output, shape index: {2}]
  %11 = xla_tuple %s8, %s9, %s10
  %s12 = sld [smem:[#allocation0]]
  $region58: #{gcn_forward.1} parent=0
    _
  %s14 = ssub.s32 1, %s12
  %s15 = scalar_select 0, %s14, %s12
  // Predicated region
  $region2: #{gcn_forward.1} parent=0 // pred_check
    _
  $region3: #{gcn_forward.1} parent=0 // pred_check_branch
    %17 = sbr.rel (0) target = $region5
  $region4: #{gcn_forward.1} parent=0 // pred_region
    _
  $region5: #{gcn_forward.1} parent=0 // pred_fallthru
    _
  // Predicated region
  $region6: #{gcn_forward.1} parent=0 // pred_check
    _
  $region7: #{gcn_forward.1} parent=0 // pred_check_branch
    %19 = sbr.rel (0) target = $region9
  $region8: #{gcn_forward.1} parent=0 // pred_region
    _
  $region9: #{gcn_forward.1} parent=0 // pred_fallthru
    _
  // Predicated region
  $region10: #{gcn_forward.1} parent=0 // pred_check
    _
  $region11: #{gcn_forward.1} parent=0 // pred_check_branch
    %21 = sbr.rel (0) target = $region13
  $region12: #{gcn_forward.1} parent=0 // pred_region
    _
  $region13: #{gcn_forward.1} parent=0 // pred_fallthru
    _
  // Predicated region
  $region14: #{gcn_forward.1} parent=0 // pred_check
    _
  $region15: #{gcn_forward.1} parent=0 // pred_check_branch
    %23 = sbr.rel (0) target = $region17
  $region16: #{gcn_forward.1} parent=0 // pred_region
    _
  $region17: #{gcn_forward.1} parent=0 // pred_fallthru
    _
  // Predicated region
  $region18: #{gcn_forward.1} parent=0 // pred_check
    _
  $region19: #{gcn_forward.1} parent=0 // pred_check_branch
    %25 = sbr.rel (0) target = $region21
  $region20: #{gcn_forward.1} parent=0 // pred_region
    _
  $region21: #{gcn_forward.1} parent=0 // pred_fallthru
    _
  // Predicated region
  $region22: #{gcn_forward.1} parent=0 // pred_check
    _
  $region23: #{gcn_forward.1} parent=0 // pred_check_branch
    %27 = sbr.rel (0) target = $region25
  $region24: #{gcn_forward.1} parent=0 // pred_region
    _
  $region25: #{gcn_forward.1} parent=0 // pred_fallthru
    _
  // Predicated region
  $region26: #{gcn_forward.1} parent=0 // pred_check
    _
  $region27: #{gcn_forward.1} parent=0 // pred_check_branch
    %29 = sbr.rel (0) target = $region29
  $region28: #{gcn_forward.1} parent=0 // pred_region
    _
  $region29: #{gcn_forward.1} parent=0 // pred_fallthru
    _
  // Predicated region
  $region30: #{gcn_forward.1} parent=0 // pred_check
    _
  $region31: #{gcn_forward.1} parent=0 // pred_check_branch
    %31 = sbr.rel (0) target = $region33
  $region32: #{gcn_forward.1} parent=0 // pred_region
    _
  $region33: #{gcn_forward.1} parent=0 // pred_fallthru
    _
  %v33 = vld [vmem:[%s0] sm:$0xf]
  %v34 = vld [vmem:[%s0 + $0x4] sm:$0xf]
  %v35 = vld [vmem:[%s0 + $0x8] sm:$0xf]
  %v36 = vld [vmem:[%s0 + $0xc] sm:$0xf]
  %v37 = vld [vmem:[%s0 + $0x10] sm:$0xf]
  %v38 = vld [vmem:[%s0 + $0x14] sm:$0xf]
  %v39 = vld [vmem:[%s0 + $0x18] sm:$0xf]
  %v40 = vld [vmem:[%s0 + $0x1c] sm:$0xf]
  %v41 = vld [vmem:[%s0 + $0x20] sm:$0xf]
  %v42 = vld [vmem:[%s0 + $0x24] sm:$0xf]
  %v43 = vld [vmem:[%s0 + $0x28] sm:$0xf]
  %v44 = vld [vmem:[%s0 + $0x2c] sm:$0xf]
  %v45 = vld [vmem:[%s0 + $0x30] sm:$0xf]
  %v46 = vld [vmem:[%s0 + $0x34] sm:$0xf]
  %v47 = vld [vmem:[%s0 + $0x38] sm:$0xf]
  %v48 = vld [vmem:[%s0 + $0x3c] sm:$0xf]
  %v49 = vld [vmem:[%s1] sm:$0xf]
  %v50 = vld [vmem:[%s1 + $0x4] sm:$0xf]
  %v51 = vld [vmem:[%s1 + $0x8] sm:$0xf]
  %v52 = vld [vmem:[%s1 + $0xc] sm:$0xf]
  %v53 = vld [vmem:[%s1 + $0x10] sm:$0xf]
  %v54 = vld [vmem:[%s1 + $0x14] sm:$0xf]
  %v55 = vld [vmem:[%s1 + $0x18] sm:$0xf]
  %v56 = vld [vmem:[%s1 + $0x1c] sm:$0xf]
  %v57 = vld [vmem:[%s1 + $0x20] sm:$0xf]
  %v58 = vld [vmem:[%s1 + $0x24] sm:$0xf]
  %v59 = vld [vmem:[%s1 + $0x28] sm:$0xf]
  %v60 = vld [vmem:[%s1 + $0x2c] sm:$0xf]
  %v61 = vld [vmem:[%s1 + $0x30] sm:$0xf]
  %v62 = vld [vmem:[%s1 + $0x34] sm:$0xf]
  %v63 = vld [vmem:[%s1 + $0x38] sm:$0xf]
  %v64 = vld [vmem:[%s1 + $0x3c] sm:$0xf]
  %v65 = vld [vmem:[%s2] sm:$0xf]
  %v66 = vld [vmem:[%s2 + $0x4] sm:$0xf]
  %v67 = vld [vmem:[%s2 + $0x8] sm:$0xf]
  %v68 = vld [vmem:[%s2 + $0xc] sm:$0xf]
  %v69 = vld [vmem:[%s2 + $0x10] sm:$0xf]
  %v70 = vld [vmem:[%s2 + $0x14] sm:$0xf]
  %v71 = vld [vmem:[%s2 + $0x18] sm:$0xf]
  %v72 = vld [vmem:[%s2 + $0x1c] sm:$0xf]
  %v73 = vld [vmem:[%s2 + $0x20] sm:$0xf]
  %v74 = vld [vmem:[%s2 + $0x24] sm:$0xf]
  %v75 = vld [vmem:[%s2 + $0x28] sm:$0xf]
  %v76 = vld [vmem:[%s2 + $0x2c] sm:$0xf]
  %v77 = vld [vmem:[%s2 + $0x30] sm:$0xf]
  %v78 = vld [vmem:[%s2 + $0x34] sm:$0xf]
  %v79 = vld [vmem:[%s2 + $0x38] sm:$0xf]
  %v80 = vld [vmem:[%s2 + $0x3c] sm:$0xf]
  %v81 = vld [vmem:[%s3] sm:$0x1]
  %v98 = vunpack.c.l.b16 %v33
  %v99 = vunpack.c.l.b16 %v34
  %v100 = vunpack.c.l.b16 %v35
  %v101 = vunpack.c.l.b16 %v36
  %v102 = vunpack.c.l.b16 %v37
  %v103 = vunpack.c.l.b16 %v38
  %v104 = vunpack.c.l.b16 %v39
  %v105 = vunpack.c.l.b16 %v40
  %v106 = vunpack.c.l.b16 %v41
  %v107 = vunpack.c.l.b16 %v42
  %v108 = vunpack.c.l.b16 %v43
  %v109 = vunpack.c.l.b16 %v44
  %v110 = vunpack.c.l.b16 %v45
  %v111 = vunpack.c.l.b16 %v46
  %v112 = vunpack.c.l.b16 %v47
  %v113 = vunpack.c.l.b16 %v48
  %v114 = vpack.c.b16 %v99, %v98
  %v115 = vpack.c.b16 %v101, %v100
  %v116 = vpack.c.b16 %v103, %v102
  %v117 = vpack.c.b16 %v105, %v104
  %v118 = vpack.c.b16 %v107, %v106
  %v119 = vpack.c.b16 %v109, %v108
  %v120 = vpack.c.b16 %v111, %v110
  %v121 = vpack.c.b16 %v113, %v112
  %v146 = vunpack.c.l.b16 %v49
  %v147 = vunpack.c.l.b16 %v50
  %v148 = vunpack.c.l.b16 %v51
  %v149 = vunpack.c.l.b16 %v52
  %v150 = vunpack.c.l.b16 %v53
  %v151 = vunpack.c.l.b16 %v54
  %v152 = vunpack.c.l.b16 %v55
  %v153 = vunpack.c.l.b16 %v56
  %v154 = vunpack.c.l.b16 %v57
  %v155 = vunpack.c.l.b16 %v58
  %v156 = vunpack.c.l.b16 %v59
  %v157 = vunpack.c.l.b16 %v60
  %v158 = vunpack.c.l.b16 %v61
  %v159 = vunpack.c.l.b16 %v62
  %v160 = vunpack.c.l.b16 %v63
  %v161 = vunpack.c.l.b16 %v64
  %v162 = vpack.c.b16 %v147, %v146
  %v163 = vpack.c.b16 %v149, %v148
  %v164 = vpack.c.b16 %v151, %v150
  %v165 = vpack.c.b16 %v153, %v152
  %v166 = vpack.c.b16 %v155, %v154
  %v167 = vpack.c.b16 %v157, %v156
  %v168 = vpack.c.b16 %v159, %v158
  %v169 = vpack.c.b16 %v161, %v160
  %178 = vmatprep.subr.bf16.mxu0 0
  %179 = vmatpush1.bf16.msra.mxu0 %v169
  %180 = vmatprep.subr.bf16.mxu0 0
  %181 = vmatpush1.bf16.msra.mxu0 %v168
  %182 = vmatprep.subr.bf16.mxu0 0
  %183 = vmatpush1.bf16.msra.mxu0 %v167
  %184 = vmatprep.subr.bf16.mxu0 0
  %185 = vmatpush1.bf16.msra.mxu0 %v166
  %186 = vmatprep.subr.bf16.mxu0 0
  %187 = vmatpush1.bf16.msra.mxu0 %v165
  %188 = vmatprep.subr.bf16.mxu0 0
  %189 = vmatpush1.bf16.msra.mxu0 %v164
  %190 = vmatprep.subr.bf16.mxu0 0
  %191 = vmatpush1.bf16.msra.mxu0 %v163
  %192 = vmatprep.subr.bf16.mxu0 0
  %193 = vmatpush1.bf16.msra.mxu0 %v162
  %194 = vmatprep.subr.bf16.mxu0 0
  %195 = vmatpush2.bf16.msra.mxu0 0
  %196 = vmatprep.subr.bf16.mxu0 0
  %197 = vmatpush2.bf16.msra.mxu0 0
  %198 = vmatprep.subr.bf16.mxu0 0
  %199 = vmatpush2.bf16.msra.mxu0 0
  %200 = vmatprep.subr.bf16.mxu0 0
  %201 = vmatpush2.bf16.msra.mxu0 0
  %202 = vmatprep.subr.bf16.mxu0 0
  %203 = vmatpush2.bf16.msra.mxu0 0
  %204 = vmatprep.subr.bf16.mxu0 0
  %205 = vmatpush2.bf16.msra.mxu0 0
  %206 = vmatprep.subr.bf16.mxu0 0
  %207 = vmatpush2.bf16.msra.mxu0 0
  %208 = vmatprep.subr.bf16.mxu0 0
  %209 = vmatpush2.bf16.msra.mxu0 0
  %210 = vmatprep.mubr.bf16.mxu0 0
  %211 = vmatmul.mubr.bf16.gmra.mxu0 %v114
  %v212 = vpop.f32.mrf.mxu0
  %v213 = vadd.f32 0.0, %v212
  %v214 = vpop.f32.mrf.mxu0
  %v215 = vpop.f32.mrf.mxu0
  %v216 = vadd.f32 0.0, %v215
  %v217 = vpop.f32.mrf.mxu0
  %218 = vmatprep.mubr.bf16.mxu0 0
  %219 = vmatmul.mubr.bf16.gmra.mxu0 %v115
  %v220 = vpop.f32.mrf.mxu0
  %v221 = vadd.f32 0.0, %v220
  %v222 = vpop.f32.mrf.mxu0
  %v223 = vpop.f32.mrf.mxu0
  %v224 = vadd.f32 0.0, %v223
  %v225 = vpop.f32.mrf.mxu0
  %226 = vmatprep.mubr.bf16.mxu0 0
  %227 = vmatmul.mubr.bf16.gmra.mxu0 %v116
  %v228 = vpop.f32.mrf.mxu0
  %v229 = vadd.f32 0.0, %v228
  %v230 = vpop.f32.mrf.mxu0
  %v231 = vpop.f32.mrf.mxu0
  %v232 = vadd.f32 0.0, %v231
  %v233 = vpop.f32.mrf.mxu0
  %234 = vmatprep.mubr.bf16.mxu0 0
  %235 = vmatmul.mubr.bf16.gmra.mxu0 %v117
  %v236 = vpop.f32.mrf.mxu0
  %v237 = vadd.f32 0.0, %v236
  %v238 = vpop.f32.mrf.mxu0
  %v239 = vpop.f32.mrf.mxu0
  %v240 = vadd.f32 0.0, %v239
  %v241 = vpop.f32.mrf.mxu0
  %242 = vmatprep.mubr.bf16.mxu0 0
  %243 = vmatmul.mubr.bf16.gmra.mxu0 %v118
  %v244 = vpop.f32.mrf.mxu0
  %v245 = vadd.f32 0.0, %v244
  %v246 = vpop.f32.mrf.mxu0
  %v247 = vpop.f32.mrf.mxu0
  %v248 = vadd.f32 0.0, %v247
  %v249 = vpop.f32.mrf.mxu0
  %250 = vmatprep.mubr.bf16.mxu0 0
  %251 = vmatmul.mubr.bf16.gmra.mxu0 %v119
  %v252 = vpop.f32.mrf.mxu0
  %v253 = vadd.f32 0.0, %v252
  %v254 = vpop.f32.mrf.mxu0
  %v255 = vpop.f32.mrf.mxu0
  %v256 = vadd.f32 0.0, %v255
  %v257 = vpop.f32.mrf.mxu0
  %258 = vmatprep.mubr.bf16.mxu0 0
  %259 = vmatmul.mubr.bf16.gmra.mxu0 %v120
  %v260 = vpop.f32.mrf.mxu0
  %v261 = vadd.f32 0.0, %v260
  %v262 = vpop.f32.mrf.mxu0
  %v263 = vpop.f32.mrf.mxu0
  %v264 = vadd.f32 0.0, %v263
  %v265 = vpop.f32.mrf.mxu0
  %266 = vmatprep.mubr.bf16.mxu0 0
  %267 = vmatmul.mubr.bf16.gmra.mxu0 %v121
  %v268 = vpop.f32.mrf.mxu0
  %v269 = vadd.f32 0.0, %v268
  %v270 = vpop.f32.mrf.mxu0
  %v271 = vpop.f32.mrf.mxu0
  %v272 = vadd.f32 0.0, %v271
  %v273 = vpop.f32.mrf.mxu0
  %274 = vdwg.mxu0
  %v275 = vpack.c.bf16 %v216, %v213
  %v276 = vpack.c.bf16 %v224, %v221
  %v277 = vpack.c.bf16 %v232, %v229
  %v278 = vpack.c.bf16 %v240, %v237
  %v279 = vpack.c.bf16 %v248, %v245
  %v280 = vpack.c.bf16 %v256, %v253
  %v281 = vpack.c.bf16 %v264, %v261
  %v282 = vpack.c.bf16 %v272, %v269
  %v284 = vlaneseq
  %v285 = vshrl.u32 %v284, 7
  %v286 = vsub.s32 0, %v285
  %v287 = vrot.slane %v81, %v286
  %v305 = vunpack.c.l.b16 %v65
  %v306 = vunpack.c.l.b16 %v66
  %v307 = vunpack.c.l.b16 %v67
  %v308 = vunpack.c.l.b16 %v68
  %v309 = vunpack.c.l.b16 %v69
  %v310 = vunpack.c.l.b16 %v70
  %v311 = vunpack.c.l.b16 %v71
  %v312 = vunpack.c.l.b16 %v72
  %v313 = vunpack.c.l.b16 %v73
  %v314 = vunpack.c.l.b16 %v74
  %v315 = vunpack.c.l.b16 %v75
  %v316 = vunpack.c.l.b16 %v76
  %v317 = vunpack.c.l.b16 %v77
  %v318 = vunpack.c.l.b16 %v78
  %v319 = vunpack.c.l.b16 %v79
  %v320 = vunpack.c.l.b16 %v80
  %v321 = vpack.c.b16 %v306, %v305
  %v322 = vpack.c.b16 %v308, %v307
  %v323 = vpack.c.b16 %v310, %v309
  %v324 = vpack.c.b16 %v312, %v311
  %v325 = vpack.c.b16 %v314, %v313
  %v326 = vpack.c.b16 %v316, %v315
  %v327 = vpack.c.b16 %v318, %v317
  %v328 = vpack.c.b16 %v320, %v319
  %337 = vmatprep.subr.bf16.mxu0 0
  %338 = vmatpush1.bf16.msra.mxu0 %v328
  %339 = vmatprep.subr.bf16.mxu0 0
  %340 = vmatpush1.bf16.msra.mxu0 %v327
  %341 = vmatprep.subr.bf16.mxu0 0
  %342 = vmatpush1.bf16.msra.mxu0 %v326
  %343 = vmatprep.subr.bf16.mxu0 0
  %344 = vmatpush1.bf16.msra.mxu0 %v325
  %345 = vmatprep.subr.bf16.mxu0 0
  %346 = vmatpush1.bf16.msra.mxu0 %v324
  %347 = vmatprep.subr.bf16.mxu0 0
  %348 = vmatpush1.bf16.msra.mxu0 %v323
  %349 = vmatprep.subr.bf16.mxu0 0
  %350 = vmatpush1.bf16.msra.mxu0 %v322
  %351 = vmatprep.subr.bf16.mxu0 0
  %352 = vmatpush1.bf16.msra.mxu0 %v321
  %353 = vmatprep.subr.bf16.mxu0 0
  %354 = vmatpush2.bf16.msra.mxu0 0
  %355 = vmatprep.subr.bf16.mxu0 0
  %356 = vmatpush2.bf16.msra.mxu0 0
  %357 = vmatprep.subr.bf16.mxu0 0
  %358 = vmatpush2.bf16.msra.mxu0 0
  %359 = vmatprep.subr.bf16.mxu0 0
  %360 = vmatpush2.bf16.msra.mxu0 0
  %361 = vmatprep.subr.bf16.mxu0 0
  %362 = vmatpush2.bf16.msra.mxu0 0
  %363 = vmatprep.subr.bf16.mxu0 0
  %364 = vmatpush2.bf16.msra.mxu0 0
  %365 = vmatprep.subr.bf16.mxu0 0
  %366 = vmatpush2.bf16.msra.mxu0 0
  %367 = vmatprep.subr.bf16.mxu0 0
  %368 = vmatpush2.bf16.msra.mxu0 0
  %369 = vmatprep.mubr.bf16.mxu0 0
  %370 = vmatmul.mubr.bf16.gmra.mxu0 %v275
  %v371 = vpop.f32.mrf.mxu0
  %v372 = vadd.f32 %v287, %v371
  %v373 = vpop.f32.mrf.mxu0
  %v374 = vpop.f32.mrf.mxu0
  %v375 = vadd.f32 %v287, %v374
  %v376 = vpop.f32.mrf.mxu0
  %377 = vmatprep.mubr.bf16.mxu0 0
  %378 = vmatmul.mubr.bf16.gmra.mxu0 %v276
  %v379 = vpop.f32.mrf.mxu0
  %v380 = vadd.f32 %v287, %v379
  %v381 = vpop.f32.mrf.mxu0
  %v382 = vpop.f32.mrf.mxu0
  %v383 = vadd.f32 %v287, %v382
  %v384 = vpop.f32.mrf.mxu0
  %385 = vmatprep.mubr.bf16.mxu0 0
  %386 = vmatmul.mubr.bf16.gmra.mxu0 %v277
  %v387 = vpop.f32.mrf.mxu0
  %v388 = vadd.f32 %v287, %v387
  %v389 = vpop.f32.mrf.mxu0
  %v390 = vpop.f32.mrf.mxu0
  %v391 = vadd.f32 %v287, %v390
  %v392 = vpop.f32.mrf.mxu0
  %393 = vmatprep.mubr.bf16.mxu0 0
  %394 = vmatmul.mubr.bf16.gmra.mxu0 %v278
  %v395 = vpop.f32.mrf.mxu0
  %v396 = vadd.f32 %v287, %v395
  %v397 = vpop.f32.mrf.mxu0
  %v398 = vpop.f32.mrf.mxu0
  %v399 = vadd.f32 %v287, %v398
  %v400 = vpop.f32.mrf.mxu0
  %401 = vmatprep.mubr.bf16.mxu0 0
  %402 = vmatmul.mubr.bf16.gmra.mxu0 %v279
  %v403 = vpop.f32.mrf.mxu0
  %v404 = vadd.f32 %v287, %v403
  %v405 = vpop.f32.mrf.mxu0
  %v406 = vpop.f32.mrf.mxu0
  %v407 = vadd.f32 %v287, %v406
  %v408 = vpop.f32.mrf.mxu0
  %409 = vmatprep.mubr.bf16.mxu0 0
  %410 = vmatmul.mubr.bf16.gmra.mxu0 %v280
  %v411 = vpop.f32.mrf.mxu0
  %v412 = vadd.f32 %v287, %v411
  %v413 = vpop.f32.mrf.mxu0
  %v414 = vpop.f32.mrf.mxu0
  %v415 = vadd.f32 %v287, %v414
  %v416 = vpop.f32.mrf.mxu0
  %417 = vmatprep.mubr.bf16.mxu0 0
  %418 = vmatmul.mubr.bf16.gmra.mxu0 %v281
  %v419 = vpop.f32.mrf.mxu0
  %v420 = vadd.f32 %v287, %v419
  %v421 = vpop.f32.mrf.mxu0
  %v422 = vpop.f32.mrf.mxu0
  %v423 = vadd.f32 %v287, %v422
  %v424 = vpop.f32.mrf.mxu0
  %425 = vmatprep.mubr.bf16.mxu0 0
  %426 = vmatmul.mubr.bf16.gmra.mxu0 %v282
  %v427 = vpop.f32.mrf.mxu0
  %v428 = vadd.f32 %v287, %v427
  %v429 = vpop.f32.mrf.mxu0
  %v430 = vpop.f32.mrf.mxu0
  %v431 = vadd.f32 %v287, %v430
  %v432 = vpop.f32.mrf.mxu0
  %433 = vdwg.mxu0
  %434 = vst [vmem:[%s8] sm:$0xff] %v372
  %435 = vst [vmem:[%s8 + $0x8] sm:$0xff] %v375
  %436 = vst [vmem:[%s8 + $0x10] sm:$0xff] %v380
  %437 = vst [vmem:[%s8 + $0x18] sm:$0xff] %v383
  %438 = vst [vmem:[%s8 + $0x20] sm:$0xff] %v388
  %439 = vst [vmem:[%s8 + $0x28] sm:$0xff] %v391
  %440 = vst [vmem:[%s8 + $0x30] sm:$0xff] %v396
  %441 = vst [vmem:[%s8 + $0x38] sm:$0xff] %v399
  %442 = vst [vmem:[%s8 + $0x40] sm:$0xff] %v404
  %443 = vst [vmem:[%s8 + $0x48] sm:$0xff] %v407
  %444 = vst [vmem:[%s8 + $0x50] sm:$0xff] %v412
  %445 = vst [vmem:[%s8 + $0x58] sm:$0xff] %v415
  %446 = vst [vmem:[%s8 + $0x60] sm:$0xff] %v420
  %447 = vst [vmem:[%s8 + $0x68] sm:$0xff] %v423
  %448 = vst [vmem:[%s8 + $0x70] sm:$0xff] %v428
  %449 = vst [vmem:[%s8 + $0x78] sm:$0xff] %v431
  %v450 = vmax.f32 %v372, 0.0
  %v451 = vmax.f32 %v375, 0.0
  %v452 = vmax.f32 %v380, 0.0
  %v453 = vmax.f32 %v383, 0.0
  %v454 = vmax.f32 %v388, 0.0
  %v455 = vmax.f32 %v391, 0.0
  %v456 = vmax.f32 %v396, 0.0
  %v457 = vmax.f32 %v399, 0.0
  %v458 = vmax.f32 %v404, 0.0
  %v459 = vmax.f32 %v407, 0.0
  %v460 = vmax.f32 %v412, 0.0
  %v461 = vmax.f32 %v415, 0.0
  %v462 = vmax.f32 %v420, 0.0
  %v463 = vmax.f32 %v423, 0.0
  %v464 = vmax.f32 %v428, 0.0
  %v465 = vmax.f32 %v431, 0.0
  %v466 = vpack.c.bf16 %v451, %v450
  %v467 = vpack.c.bf16 %v453, %v452
  %v468 = vpack.c.bf16 %v455, %v454
  %v469 = vpack.c.bf16 %v457, %v456
  %v470 = vpack.c.bf16 %v459, %v458
  %v471 = vpack.c.bf16 %v461, %v460
  %v472 = vpack.c.bf16 %v463, %v462
  %v473 = vpack.c.bf16 %v465, %v464
  %v474 = vld [vmem:[%s4] sm:$0xf]
  %v475 = vld [vmem:[%s4 + $0x4] sm:$0xf]
  %v476 = vld [vmem:[%s4 + $0x8] sm:$0xf]
  %v477 = vld [vmem:[%s4 + $0xc] sm:$0xf]
  %v478 = vld [vmem:[%s4 + $0x10] sm:$0xf]
  %v479 = vld [vmem:[%s4 + $0x14] sm:$0xf]
  %v480 = vld [vmem:[%s4 + $0x18] sm:$0xf]
  %v481 = vld [vmem:[%s4 + $0x1c] sm:$0xf]
  %v482 = vld [vmem:[%s4 + $0x20] sm:$0xf]
  %v483 = vld [vmem:[%s4 + $0x24] sm:$0xf]
  %v484 = vld [vmem:[%s4 + $0x28] sm:$0xf]
  %v485 = vld [vmem:[%s4 + $0x2c] sm:$0xf]
  %v486 = vld [vmem:[%s4 + $0x30] sm:$0xf]
  %v487 = vld [vmem:[%s4 + $0x34] sm:$0xf]
  %v488 = vld [vmem:[%s4 + $0x38] sm:$0xf]
  %v489 = vld [vmem:[%s4 + $0x3c] sm:$0xf]
  %v490 = vld [vmem:[%s5] sm:$0x1]
  %491 = vmatprep.subr.bf16.mxu0 0
  %492 = vmatpush1.bf16.msra.mxu0 %v473
  %493 = vmatprep.subr.bf16.mxu0 0
  %494 = vmatpush1.bf16.msra.mxu0 %v472
  %495 = vmatprep.subr.bf16.mxu0 0
  %496 = vmatpush1.bf16.msra.mxu0 %v471
  %497 = vmatprep.subr.bf16.mxu0 0
  %498 = vmatpush1.bf16.msra.mxu0 %v470
  %499 = vmatprep.subr.bf16.mxu0 0
  %500 = vmatpush1.bf16.msra.mxu0 %v469
  %501 = vmatprep.subr.bf16.mxu0 0
  %502 = vmatpush1.bf16.msra.mxu0 %v468
  %503 = vmatprep.subr.bf16.mxu0 0
  %504 = vmatpush1.bf16.msra.mxu0 %v467
  %505 = vmatprep.subr.bf16.mxu0 0
  %506 = vmatpush1.bf16.msra.mxu0 %v466
  %507 = vmatprep.subr.bf16.mxu0 0
  %508 = vmatpush2.bf16.msra.mxu0 0
  %509 = vmatprep.subr.bf16.mxu0 0
  %510 = vmatpush2.bf16.msra.mxu0 0
  %511 = vmatprep.subr.bf16.mxu0 0
  %512 = vmatpush2.bf16.msra.mxu0 0
  %513 = vmatprep.subr.bf16.mxu0 0
  %514 = vmatpush2.bf16.msra.mxu0 0
  %515 = vmatprep.subr.bf16.mxu0 0
  %516 = vmatpush2.bf16.msra.mxu0 0
  %517 = vmatprep.subr.bf16.mxu0 0
  %518 = vmatpush2.bf16.msra.mxu0 0
  %519 = vmatprep.subr.bf16.mxu0 0
  %520 = vmatpush2.bf16.msra.mxu0 0
  %521 = vmatprep.subr.bf16.mxu0 0
  %522 = vmatpush2.bf16.msra.mxu0 0
  %523 = vmatprep.mubr.bf16.mxu0 0
  %524 = vmatmul.mubr.bf16.gmra.mxu0 %v114
  %v525 = vpop.f32.mrf.mxu0
  %v526 = vadd.f32 0.0, %v525
  %v527 = vpop.f32.mrf.mxu0
  %v528 = vpop.f32.mrf.mxu0
  %v529 = vadd.f32 0.0, %v528
  %v530 = vpop.f32.mrf.mxu0
  %531 = vmatprep.mubr.bf16.mxu0 0
  %532 = vmatmul.mubr.bf16.gmra.mxu0 %v115
  %v533 = vpop.f32.mrf.mxu0
  %v534 = vadd.f32 0.0, %v533
  %v535 = vpop.f32.mrf.mxu0
  %v536 = vpop.f32.mrf.mxu0
  %v537 = vadd.f32 0.0, %v536
  %v538 = vpop.f32.mrf.mxu0
  %539 = vmatprep.mubr.bf16.mxu0 0
  %540 = vmatmul.mubr.bf16.gmra.mxu0 %v116
  %v541 = vpop.f32.mrf.mxu0
  %v542 = vadd.f32 0.0, %v541
  %v543 = vpop.f32.mrf.mxu0
  %v544 = vpop.f32.mrf.mxu0
  %v545 = vadd.f32 0.0, %v544
  %v546 = vpop.f32.mrf.mxu0
  %547 = vmatprep.mubr.bf16.mxu0 0
  %548 = vmatmul.mubr.bf16.gmra.mxu0 %v117
  %v549 = vpop.f32.mrf.mxu0
  %v550 = vadd.f32 0.0, %v549
  %v551 = vpop.f32.mrf.mxu0
  %v552 = vpop.f32.mrf.mxu0
  %v553 = vadd.f32 0.0, %v552
  %v554 = vpop.f32.mrf.mxu0
  %555 = vmatprep.mubr.bf16.mxu0 0
  %556 = vmatmul.mubr.bf16.gmra.mxu0 %v118
  %v557 = vpop.f32.mrf.mxu0
  %v558 = vadd.f32 0.0, %v557
  %v559 = vpop.f32.mrf.mxu0
  %v560 = vpop.f32.mrf.mxu0
  %v561 = vadd.f32 0.0, %v560
  %v562 = vpop.f32.mrf.mxu0
  %563 = vmatprep.mubr.bf16.mxu0 0
  %564 = vmatmul.mubr.bf16.gmra.mxu0 %v119
  %v565 = vpop.f32.mrf.mxu0
  %v566 = vadd.f32 0.0, %v565
  %v567 = vpop.f32.mrf.mxu0
  %v568 = vpop.f32.mrf.mxu0
  %v569 = vadd.f32 0.0, %v568
  %v570 = vpop.f32.mrf.mxu0
  %571 = vmatprep.mubr.bf16.mxu0 0
  %572 = vmatmul.mubr.bf16.gmra.mxu0 %v120
  %v573 = vpop.f32.mrf.mxu0
  %v574 = vadd.f32 0.0, %v573
  %v575 = vpop.f32.mrf.mxu0
  %v576 = vpop.f32.mrf.mxu0
  %v577 = vadd.f32 0.0, %v576
  %v578 = vpop.f32.mrf.mxu0
  %579 = vmatprep.mubr.bf16.mxu0 0
  %580 = vmatmul.mubr.bf16.gmra.mxu0 %v121
  %v581 = vpop.f32.mrf.mxu0
  %v582 = vadd.f32 0.0, %v581
  %v583 = vpop.f32.mrf.mxu0
  %v584 = vpop.f32.mrf.mxu0
  %v585 = vadd.f32 0.0, %v584
  %v586 = vpop.f32.mrf.mxu0
  %587 = vdwg.mxu0
  %v588 = vpack.c.bf16 %v529, %v526
  %v589 = vpack.c.bf16 %v537, %v534
  %v590 = vpack.c.bf16 %v545, %v542
  %v591 = vpack.c.bf16 %v553, %v550
  %v592 = vpack.c.bf16 %v561, %v558
  %v593 = vpack.c.bf16 %v569, %v566
  %v594 = vpack.c.bf16 %v577, %v574
  %v595 = vpack.c.bf16 %v585, %v582
  %v597 = vlaneseq
  %v598 = vshrl.u32 %v597, 7
  %v599 = vsub.s32 0, %v598
  %v600 = vrot.slane %v490, %v599
  %v618 = vunpack.c.l.b16 %v474
  %v619 = vunpack.c.l.b16 %v475
  %v620 = vunpack.c.l.b16 %v476
  %v621 = vunpack.c.l.b16 %v477
  %v622 = vunpack.c.l.b16 %v478
  %v623 = vunpack.c.l.b16 %v479
  %v624 = vunpack.c.l.b16 %v480
  %v625 = vunpack.c.l.b16 %v481
  %v626 = vunpack.c.l.b16 %v482
  %v627 = vunpack.c.l.b16 %v483
  %v628 = vunpack.c.l.b16 %v484
  %v629 = vunpack.c.l.b16 %v485
  %v630 = vunpack.c.l.b16 %v486
  %v631 = vunpack.c.l.b16 %v487
  %v632 = vunpack.c.l.b16 %v488
  %v633 = vunpack.c.l.b16 %v489
  %v634 = vpack.c.b16 %v619, %v618
  %v635 = vpack.c.b16 %v621, %v620
  %v636 = vpack.c.b16 %v623, %v622
  %v637 = vpack.c.b16 %v625, %v624
  %v638 = vpack.c.b16 %v627, %v626
  %v639 = vpack.c.b16 %v629, %v628
  %v640 = vpack.c.b16 %v631, %v630
  %v641 = vpack.c.b16 %v633, %v632
  %650 = vmatprep.subr.bf16.mxu0 0
  %651 = vmatpush1.bf16.msra.mxu0 %v641
  %652 = vmatprep.subr.bf16.mxu0 0
  %653 = vmatpush1.bf16.msra.mxu0 %v640
  %654 = vmatprep.subr.bf16.mxu0 0
  %655 = vmatpush1.bf16.msra.mxu0 %v639
  %656 = vmatprep.subr.bf16.mxu0 0
  %657 = vmatpush1.bf16.msra.mxu0 %v638
  %658 = vmatprep.subr.bf16.mxu0 0
  %659 = vmatpush1.bf16.msra.mxu0 %v637
  %660 = vmatprep.subr.bf16.mxu0 0
  %661 = vmatpush1.bf16.msra.mxu0 %v636
  %662 = vmatprep.subr.bf16.mxu0 0
  %663 = vmatpush1.bf16.msra.mxu0 %v635
  %664 = vmatprep.subr.bf16.mxu0 0
  %665 = vmatpush1.bf16.msra.mxu0 %v634
  %666 = vmatprep.subr.bf16.mxu0 0
  %667 = vmatpush2.bf16.msra.mxu0 0
  %668 = vmatprep.subr.bf16.mxu0 0
  %669 = vmatpush2.bf16.msra.mxu0 0
  %670 = vmatprep.subr.bf16.mxu0 0
  %671 = vmatpush2.bf16.msra.mxu0 0
  %672 = vmatprep.subr.bf16.mxu0 0
  %673 = vmatpush2.bf16.msra.mxu0 0
  %674 = vmatprep.subr.bf16.mxu0 0
  %675 = vmatpush2.bf16.msra.mxu0 0
  %676 = vmatprep.subr.bf16.mxu0 0
  %677 = vmatpush2.bf16.msra.mxu0 0
  %678 = vmatprep.subr.bf16.mxu0 0
  %679 = vmatpush2.bf16.msra.mxu0 0
  %680 = vmatprep.subr.bf16.mxu0 0
  %681 = vmatpush2.bf16.msra.mxu0 0
  %682 = vmatprep.mubr.bf16.mxu0 0
  %683 = vmatmul.mubr.bf16.gmra.mxu0 %v588
  %v684 = vpop.f32.mrf.mxu0
  %v685 = vadd.f32 %v600, %v684
  %v686 = vpop.f32.mrf.mxu0
  %v687 = vpop.f32.mrf.mxu0
  %v688 = vadd.f32 %v600, %v687
  %v689 = vpop.f32.mrf.mxu0
  %690 = vmatprep.mubr.bf16.mxu0 0
  %691 = vmatmul.mubr.bf16.gmra.mxu0 %v589
  %v692 = vpop.f32.mrf.mxu0
  %v693 = vadd.f32 %v600, %v692
  %v694 = vpop.f32.mrf.mxu0
  %v695 = vpop.f32.mrf.mxu0
  %v696 = vadd.f32 %v600, %v695
  %v697 = vpop.f32.mrf.mxu0
  %698 = vmatprep.mubr.bf16.mxu0 0
  %699 = vmatmul.mubr.bf16.gmra.mxu0 %v590
  %v700 = vpop.f32.mrf.mxu0
  %v701 = vadd.f32 %v600, %v700
  %v702 = vpop.f32.mrf.mxu0
  %v703 = vpop.f32.mrf.mxu0
  %v704 = vadd.f32 %v600, %v703
  %v705 = vpop.f32.mrf.mxu0
  %706 = vmatprep.mubr.bf16.mxu0 0
  %707 = vmatmul.mubr.bf16.gmra.mxu0 %v591
  %v708 = vpop.f32.mrf.mxu0
  %v709 = vadd.f32 %v600, %v708
  %v710 = vpop.f32.mrf.mxu0
  %v711 = vpop.f32.mrf.mxu0
  %v712 = vadd.f32 %v600, %v711
  %v713 = vpop.f32.mrf.mxu0
  %714 = vmatprep.mubr.bf16.mxu0 0
  %715 = vmatmul.mubr.bf16.gmra.mxu0 %v592
  %v716 = vpop.f32.mrf.mxu0
  %v717 = vadd.f32 %v600, %v716
  %v718 = vpop.f32.mrf.mxu0
  %v719 = vpop.f32.mrf.mxu0
  %v720 = vadd.f32 %v600, %v719
  %v721 = vpop.f32.mrf.mxu0
  %722 = vmatprep.mubr.bf16.mxu0 0
  %723 = vmatmul.mubr.bf16.gmra.mxu0 %v593
  %v724 = vpop.f32.mrf.mxu0
  %v725 = vadd.f32 %v600, %v724
  %v726 = vpop.f32.mrf.mxu0
  %v727 = vpop.f32.mrf.mxu0
  %v728 = vadd.f32 %v600, %v727
  %v729 = vpop.f32.mrf.mxu0
  %730 = vmatprep.mubr.bf16.mxu0 0
  %731 = vmatmul.mubr.bf16.gmra.mxu0 %v594
  %v732 = vpop.f32.mrf.mxu0
  %v733 = vadd.f32 %v600, %v732
  %v734 = vpop.f32.mrf.mxu0
  %v735 = vpop.f32.mrf.mxu0
  %v736 = vadd.f32 %v600, %v735
  %v737 = vpop.f32.mrf.mxu0
  %738 = vmatprep.mubr.bf16.mxu0 0
  %739 = vmatmul.mubr.bf16.gmra.mxu0 %v595
  %v740 = vpop.f32.mrf.mxu0
  %v741 = vadd.f32 %v600, %v740
  %v742 = vpop.f32.mrf.mxu0
  %v743 = vpop.f32.mrf.mxu0
  %v744 = vadd.f32 %v600, %v743
  %v745 = vpop.f32.mrf.mxu0
  %746 = vdwg.mxu0
  %747 = vst [vmem:[%s9] sm:$0xff] %v685
  %748 = vst [vmem:[%s9 + $0x8] sm:$0xff] %v688
  %749 = vst [vmem:[%s9 + $0x10] sm:$0xff] %v693
  %750 = vst [vmem:[%s9 + $0x18] sm:$0xff] %v696
  %751 = vst [vmem:[%s9 + $0x20] sm:$0xff] %v701
  %752 = vst [vmem:[%s9 + $0x28] sm:$0xff] %v704
  %753 = vst [vmem:[%s9 + $0x30] sm:$0xff] %v709
  %754 = vst [vmem:[%s9 + $0x38] sm:$0xff] %v712
  %755 = vst [vmem:[%s9 + $0x40] sm:$0xff] %v717
  %756 = vst [vmem:[%s9 + $0x48] sm:$0xff] %v720
  %757 = vst [vmem:[%s9 + $0x50] sm:$0xff] %v725
  %758 = vst [vmem:[%s9 + $0x58] sm:$0xff] %v728
  %759 = vst [vmem:[%s9 + $0x60] sm:$0xff] %v733
  %760 = vst [vmem:[%s9 + $0x68] sm:$0xff] %v736
  %761 = vst [vmem:[%s9 + $0x70] sm:$0xff] %v741
  %762 = vst [vmem:[%s9 + $0x78] sm:$0xff] %v744
  %v763 = vmax.f32 %v685, 0.0
  %v764 = vmax.f32 %v688, 0.0
  %v765 = vmax.f32 %v693, 0.0
  %v766 = vmax.f32 %v696, 0.0
  %v767 = vmax.f32 %v701, 0.0
  %v768 = vmax.f32 %v704, 0.0
  %v769 = vmax.f32 %v709, 0.0
  %v770 = vmax.f32 %v712, 0.0
  %v771 = vmax.f32 %v717, 0.0
  %v772 = vmax.f32 %v720, 0.0
  %v773 = vmax.f32 %v725, 0.0
  %v774 = vmax.f32 %v728, 0.0
  %v775 = vmax.f32 %v733, 0.0
  %v776 = vmax.f32 %v736, 0.0
  %v777 = vmax.f32 %v741, 0.0
  %v778 = vmax.f32 %v744, 0.0
  %v779 = vpack.c.bf16 %v764, %v763
  %v780 = vpack.c.bf16 %v766, %v765
  %v781 = vpack.c.bf16 %v768, %v767
  %v782 = vpack.c.bf16 %v770, %v769
  %v783 = vpack.c.bf16 %v772, %v771
  %v784 = vpack.c.bf16 %v774, %v773
  %v785 = vpack.c.bf16 %v776, %v775
  %v786 = vpack.c.bf16 %v778, %v777
  %v787 = vld [vmem:[%s6] sm:$0xf]
  %v788 = vld [vmem:[%s6 + $0x4] sm:$0xf]
  %v789 = vld [vmem:[%s6 + $0x8] sm:$0xf]
  %v790 = vld [vmem:[%s6 + $0xc] sm:$0xf]
  %v791 = vld [vmem:[%s6 + $0x10] sm:$0xf]
  %v792 = vld [vmem:[%s6 + $0x14] sm:$0xf]
  %v793 = vld [vmem:[%s6 + $0x18] sm:$0xf]
  %v794 = vld [vmem:[%s6 + $0x1c] sm:$0xf]
  %v795 = vld [vmem:[%s6 + $0x20] sm:$0xf]
  %v796 = vld [vmem:[%s6 + $0x24] sm:$0xf]
  %v797 = vld [vmem:[%s6 + $0x28] sm:$0xf]
  %v798 = vld [vmem:[%s6 + $0x2c] sm:$0xf]
  %v799 = vld [vmem:[%s6 + $0x30] sm:$0xf]
  %v800 = vld [vmem:[%s6 + $0x34] sm:$0xf]
  %v801 = vld [vmem:[%s6 + $0x38] sm:$0xf]
  %v802 = vld [vmem:[%s6 + $0x3c] sm:$0xf]
  %v803 = vld [vmem:[%s7] sm:$0x1]
  %v820 = vunpack.c.l.b16 %v787
  %v821 = vunpack.c.l.b16 %v788
  %v822 = vunpack.c.l.b16 %v789
  %v823 = vunpack.c.l.b16 %v790
  %v824 = vunpack.c.l.b16 %v791
  %v825 = vunpack.c.l.b16 %v792
  %v826 = vunpack.c.l.b16 %v793
  %v827 = vunpack.c.l.b16 %v794
  %v828 = vunpack.c.l.b16 %v795
  %v829 = vunpack.c.l.b16 %v796
  %v830 = vunpack.c.l.b16 %v797
  %v831 = vunpack.c.l.b16 %v798
  %v832 = vunpack.c.l.b16 %v799
  %v833 = vunpack.c.l.b16 %v800
  %v834 = vunpack.c.l.b16 %v801
  %v835 = vunpack.c.l.b16 %v802
  %v836 = vpack.c.b16 %v821, %v820
  %v837 = vpack.c.b16 %v823, %v822
  %v838 = vpack.c.b16 %v825, %v824
  %v839 = vpack.c.b16 %v827, %v826
  %v840 = vpack.c.b16 %v829, %v828
  %v841 = vpack.c.b16 %v831, %v830
  %v842 = vpack.c.b16 %v833, %v832
  %v843 = vpack.c.b16 %v835, %v834
  %852 = vmatprep.subr.bf16.mxu0 0
  %853 = vmatpush1.bf16.msra.mxu0 %v843
  %854 = vmatprep.subr.bf16.mxu0 0
  %855 = vmatpush1.bf16.msra.mxu0 %v842
  %856 = vmatprep.subr.bf16.mxu0 0
  %857 = vmatpush1.bf16.msra.mxu0 %v841
  %858 = vmatprep.subr.bf16.mxu0 0
  %859 = vmatpush1.bf16.msra.mxu0 %v840
  %860 = vmatprep.subr.bf16.mxu0 0
  %861 = vmatpush1.bf16.msra.mxu0 %v839
  %862 = vmatprep.subr.bf16.mxu0 0
  %863 = vmatpush1.bf16.msra.mxu0 %v838
  %864 = vmatprep.subr.bf16.mxu0 0
  %865 = vmatpush1.bf16.msra.mxu0 %v837
  %866 = vmatprep.subr.bf16.mxu0 0
  %867 = vmatpush1.bf16.msra.mxu0 %v836
  %868 = vmatprep.subr.bf16.mxu0 0
  %869 = vmatpush2.bf16.msra.mxu0 0
  %870 = vmatprep.subr.bf16.mxu0 0
  %871 = vmatpush2.bf16.msra.mxu0 0
  %872 = vmatprep.subr.bf16.mxu0 0
  %873 = vmatpush2.bf16.msra.mxu0 0
  %874 = vmatprep.subr.bf16.mxu0 0
  %875 = vmatpush2.bf16.msra.mxu0 0
  %876 = vmatprep.subr.bf16.mxu0 0
  %877 = vmatpush2.bf16.msra.mxu0 0
  %878 = vmatprep.subr.bf16.mxu0 0
  %879 = vmatpush2.bf16.msra.mxu0 0
  %880 = vmatprep.subr.bf16.mxu0 0
  %881 = vmatpush2.bf16.msra.mxu0 0
  %882 = vmatprep.subr.bf16.mxu0 0
  %883 = vmatpush2.bf16.msra.mxu0 0
  %884 = vmatprep.mubr.bf16.mxu0 0
  %885 = vmatmul.mubr.bf16.gmra.mxu0 %v779
  %v886 = vpop.f32.mrf.mxu0
  %v887 = vadd.f32 0.0, %v886
  %v888 = vpop.f32.mrf.mxu0
  %v889 = vpop.f32.mrf.mxu0
  %v890 = vadd.f32 0.0, %v889
  %v891 = vpop.f32.mrf.mxu0
  %892 = vmatprep.mubr.bf16.mxu0 0
  %893 = vmatmul.mubr.bf16.gmra.mxu0 %v780
  %v894 = vpop.f32.mrf.mxu0
  %v895 = vadd.f32 0.0, %v894
  %v896 = vpop.f32.mrf.mxu0
  %v897 = vpop.f32.mrf.mxu0
  %v898 = vadd.f32 0.0, %v897
  %v899 = vpop.f32.mrf.mxu0
  %900 = vmatprep.mubr.bf16.mxu0 0
  %901 = vmatmul.mubr.bf16.gmra.mxu0 %v781
  %v902 = vpop.f32.mrf.mxu0
  %v903 = vadd.f32 0.0, %v902
  %v904 = vpop.f32.mrf.mxu0
  %v905 = vpop.f32.mrf.mxu0
  %v906 = vadd.f32 0.0, %v905
  %v907 = vpop.f32.mrf.mxu0
  %908 = vmatprep.mubr.bf16.mxu0 0
  %909 = vmatmul.mubr.bf16.gmra.mxu0 %v782
  %v910 = vpop.f32.mrf.mxu0
  %v911 = vadd.f32 0.0, %v910
  %v912 = vpop.f32.mrf.mxu0
  %v913 = vpop.f32.mrf.mxu0
  %v914 = vadd.f32 0.0, %v913
  %v915 = vpop.f32.mrf.mxu0
  %916 = vmatprep.mubr.bf16.mxu0 0
  %917 = vmatmul.mubr.bf16.gmra.mxu0 %v783
  %v918 = vpop.f32.mrf.mxu0
  %v919 = vadd.f32 0.0, %v918
  %v920 = vpop.f32.mrf.mxu0
  %v921 = vpop.f32.mrf.mxu0
  %v922 = vadd.f32 0.0, %v921
  %v923 = vpop.f32.mrf.mxu0
  %924 = vmatprep.mubr.bf16.mxu0 0
  %925 = vmatmul.mubr.bf16.gmra.mxu0 %v784
  %v926 = vpop.f32.mrf.mxu0
  %v927 = vadd.f32 0.0, %v926
  %v928 = vpop.f32.mrf.mxu0
  %v929 = vpop.f32.mrf.mxu0
  %v930 = vadd.f32 0.0, %v929
  %v931 = vpop.f32.mrf.mxu0
  %932 = vmatprep.mubr.bf16.mxu0 0
  %933 = vmatmul.mubr.bf16.gmra.mxu0 %v785
  %v934 = vpop.f32.mrf.mxu0
  %v935 = vadd.f32 0.0, %v934
  %v936 = vpop.f32.mrf.mxu0
  %v937 = vpop.f32.mrf.mxu0
  %v938 = vadd.f32 0.0, %v937
  %v939 = vpop.f32.mrf.mxu0
  %940 = vmatprep.mubr.bf16.mxu0 0
  %941 = vmatmul.mubr.bf16.gmra.mxu0 %v786
  %v942 = vpop.f32.mrf.mxu0
  %v943 = vadd.f32 0.0, %v942
  %v944 = vpop.f32.mrf.mxu0
  %v945 = vpop.f32.mrf.mxu0
  %v946 = vadd.f32 0.0, %v945
  %v947 = vpop.f32.mrf.mxu0
  %948 = vdwg.mxu0
  %v949 = vpack.c.bf16 %v890, %v887
  %v950 = vpack.c.bf16 %v898, %v895
  %v951 = vpack.c.bf16 %v906, %v903
  %v952 = vpack.c.bf16 %v914, %v911
  %v953 = vpack.c.bf16 %v922, %v919
  %v954 = vpack.c.bf16 %v930, %v927
  %v955 = vpack.c.bf16 %v938, %v935
  %v956 = vpack.c.bf16 %v946, %v943
  %v958 = vlaneseq
  %v959 = vshrl.u32 %v958, 7
  %v960 = vsub.s32 0, %v959
  %v961 = vrot.slane %v803, %v960
  %963 = vmatprep.subr.bf16.mxu0 0
  %964 = vmatpush1.bf16.msra.mxu0 %v956
  %965 = vmatprep.subr.bf16.mxu0 0
  %966 = vmatpush1.bf16.msra.mxu0 %v955
  %967 = vmatprep.subr.bf16.mxu0 0
  %968 = vmatpush1.bf16.msra.mxu0 %v954
  %969 = vmatprep.subr.bf16.mxu0 0
  %970 = vmatpush1.bf16.msra.mxu0 %v953
  %971 = vmatprep.subr.bf16.mxu0 0
  %972 = vmatpush1.bf16.msra.mxu0 %v952
  %973 = vmatprep.subr.bf16.mxu0 0
  %974 = vmatpush1.bf16.msra.mxu0 %v951
  %975 = vmatprep.subr.bf16.mxu0 0
  %976 = vmatpush1.bf16.msra.mxu0 %v950
  %977 = vmatprep.subr.bf16.mxu0 0
  %978 = vmatpush1.bf16.msra.mxu0 %v949
  %979 = vmatprep.subr.bf16.mxu0 0
  %980 = vmatpush2.bf16.msra.mxu0 0
  %981 = vmatprep.subr.bf16.mxu0 0
  %982 = vmatpush2.bf16.msra.mxu0 0
  %983 = vmatprep.subr.bf16.mxu0 0
  %984 = vmatpush2.bf16.msra.mxu0 0
  %985 = vmatprep.subr.bf16.mxu0 0
  %986 = vmatpush2.bf16.msra.mxu0 0
  %987 = vmatprep.subr.bf16.mxu0 0
  %988 = vmatpush2.bf16.msra.mxu0 0
  %989 = vmatprep.subr.bf16.mxu0 0
  %990 = vmatpush2.bf16.msra.mxu0 0
  %991 = vmatprep.subr.bf16.mxu0 0
  %992 = vmatpush2.bf16.msra.mxu0 0
  %993 = vmatprep.subr.bf16.mxu0 0
  %994 = vmatpush2.bf16.msra.mxu0 0
  %995 = vmatprep.mubr.bf16.mxu0 0
  %996 = vmatmul.mubr.bf16.gmra.mxu0 %v114
  %v997 = vpop.f32.mrf.mxu0
  %v998 = vadd.f32 %v961, %v997
  %v999 = vpop.f32.mrf.mxu0
  %v1000 = vpop.f32.mrf.mxu0
  %v1001 = vadd.f32 %v961, %v1000
  %v1002 = vpop.f32.mrf.mxu0
  %1003 = vmatprep.mubr.bf16.mxu0 0
  %1004 = vmatmul.mubr.bf16.gmra.mxu0 %v115
  %v1005 = vpop.f32.mrf.mxu0
  %v1006 = vadd.f32 %v961, %v1005
  %v1007 = vpop.f32.mrf.mxu0
  %v1008 = vpop.f32.mrf.mxu0
  %v1009 = vadd.f32 %v961, %v1008
  %v1010 = vpop.f32.mrf.mxu0
  %1011 = vmatprep.mubr.bf16.mxu0 0
  %1012 = vmatmul.mubr.bf16.gmra.mxu0 %v116
  %v1013 = vpop.f32.mrf.mxu0
  %v1014 = vadd.f32 %v961, %v1013
  %v1015 = vpop.f32.mrf.mxu0
  %v1016 = vpop.f32.mrf.mxu0
  %v1017 = vadd.f32 %v961, %v1016
  %v1018 = vpop.f32.mrf.mxu0
  %1019 = vmatprep.mubr.bf16.mxu0 0
  %1020 = vmatmul.mubr.bf16.gmra.mxu0 %v117
  %v1021 = vpop.f32.mrf.mxu0
  %v1022 = vadd.f32 %v961, %v1021
  %v1023 = vpop.f32.mrf.mxu0
  %v1024 = vpop.f32.mrf.mxu0
  %v1025 = vadd.f32 %v961, %v1024
  %v1026 = vpop.f32.mrf.mxu0
  %1027 = vmatprep.mubr.bf16.mxu0 0
  %1028 = vmatmul.mubr.bf16.gmra.mxu0 %v118
  %v1029 = vpop.f32.mrf.mxu0
  %v1030 = vadd.f32 %v961, %v1029
  %v1031 = vpop.f32.mrf.mxu0
  %v1032 = vpop.f32.mrf.mxu0
  %v1033 = vadd.f32 %v961, %v1032
  %v1034 = vpop.f32.mrf.mxu0
  %1035 = vmatprep.mubr.bf16.mxu0 0
  %1036 = vmatmul.mubr.bf16.gmra.mxu0 %v119
  %v1037 = vpop.f32.mrf.mxu0
  %v1038 = vadd.f32 %v961, %v1037
  %v1039 = vpop.f32.mrf.mxu0
  %v1040 = vpop.f32.mrf.mxu0
  %v1041 = vadd.f32 %v961, %v1040
  %v1042 = vpop.f32.mrf.mxu0
  %1043 = vmatprep.mubr.bf16.mxu0 0
  %1044 = vmatmul.mubr.bf16.gmra.mxu0 %v120
  %v1045 = vpop.f32.mrf.mxu0
  %v1046 = vadd.f32 %v961, %v1045
  %v1047 = vpop.f32.mrf.mxu0
  %v1048 = vpop.f32.mrf.mxu0
  %v1049 = vadd.f32 %v961, %v1048
  %v1050 = vpop.f32.mrf.mxu0
  %1051 = vmatprep.mubr.bf16.mxu0 0
  %1052 = vmatmul.mubr.bf16.gmra.mxu0 %v121
  %v1053 = vpop.f32.mrf.mxu0
  %v1054 = vadd.f32 %v961, %v1053
  %v1055 = vpop.f32.mrf.mxu0
  %v1056 = vpop.f32.mrf.mxu0
  %v1057 = vadd.f32 %v961, %v1056
  %v1058 = vpop.f32.mrf.mxu0
  %1059 = vdwg.mxu0
  %1060 = vst [vmem:[%s10] sm:$0xff] %v998
  %1061 = vst [vmem:[%s10 + $0x8] sm:$0xff] %v1001
  %1062 = vst [vmem:[%s10 + $0x10] sm:$0xff] %v1006
  %1063 = vst [vmem:[%s10 + $0x18] sm:$0xff] %v1009
  %1064 = vst [vmem:[%s10 + $0x20] sm:$0xff] %v1014
  %1065 = vst [vmem:[%s10 + $0x28] sm:$0xff] %v1017
  %1066 = vst [vmem:[%s10 + $0x30] sm:$0xff] %v1022
  %1067 = vst [vmem:[%s10 + $0x38] sm:$0xff] %v1025
  %1068 = vst [vmem:[%s10 + $0x40] sm:$0xff] %v1030
  %1069 = vst [vmem:[%s10 + $0x48] sm:$0xff] %v1033
  %1070 = vst [vmem:[%s10 + $0x50] sm:$0xff] %v1038
  %1071 = vst [vmem:[%s10 + $0x58] sm:$0xff] %v1041
  %1072 = vst [vmem:[%s10 + $0x60] sm:$0xff] %v1046
  %1073 = vst [vmem:[%s10 + $0x68] sm:$0xff] %v1049
  %1074 = vst [vmem:[%s10 + $0x70] sm:$0xff] %v1054
  %1075 = vst [vmem:[%s10 + $0x78] sm:$0xff] %v1057
  // Predicated region
  $region34: #{gcn_forward.1} parent=0 // pred_check
    _
  $region35: #{gcn_forward.1} parent=0 // pred_check_branch
    %1077 = sbr.rel (0) target = $region37
  $region36: #{gcn_forward.1} parent=0 // pred_region
    _
  $region37: #{gcn_forward.1} parent=0 // pred_fallthru
    _
  // Predicated region
  $region38: #{gcn_forward.1} parent=0 // pred_check
    _
  $region39: #{gcn_forward.1} parent=0 // pred_check_branch
    %1079 = sbr.rel (0) target = $region41
  $region40: #{gcn_forward.1} parent=0 // pred_region
    _
  $region41: #{gcn_forward.1} parent=0 // pred_fallthru
    _
  // Predicated region
  $region42: #{gcn_forward.1} parent=0 // pred_check
    _
  $region43: #{gcn_forward.1} parent=0 // pred_check_branch
    %1081 = sbr.rel (0) target = $region45
  $region44: #{gcn_forward.1} parent=0 // pred_region
    _
  $region45: #{gcn_forward.1} parent=0 // pred_fallthru
    _
  // Predicated region
  $region46: #{gcn_forward.1} parent=0 // pred_check
    _
  $region47: #{gcn_forward.1} parent=0 // pred_check_branch
    %1083 = sbr.rel (0) target = $region49
  $region48: #{gcn_forward.1} parent=0 // pred_region
    _
  $region49: #{gcn_forward.1} parent=0 // pred_fallthru
    _
  // Predicated region
  $region50: #{gcn_forward.1} parent=0 // pred_check
    _
  $region51: #{gcn_forward.1} parent=0 // pred_check_branch
    %1085 = sbr.rel (0) target = $region53
  $region52: #{gcn_forward.1} parent=0 // pred_region
    _
  $region53: #{gcn_forward.1} parent=0 // pred_fallthru
    _
  // Predicated region
  $region54: #{gcn_forward.1} parent=0 // pred_check
    _
  $region55: #{gcn_forward.1} parent=0 // pred_check_branch
    %1087 = sbr.rel (0) target = $region57
  $region56: #{gcn_forward.1} parent=0 // pred_region
    _
  $region57: #{gcn_forward.1} parent=0 // pred_fallthru
    _

</llo_original>
